<compile_context>
chip_gen: v6e
topology: v6e:2x2x1
jax: 0.10.0
libtpu: 0.0.40
codegen_flags: <defaults>
</compile_context>

<pallas_src>
import functools

import jax
import jax.numpy as jnp
import numpy as np
from jax import lax
from jax.experimental import pallas as pl
from jax.experimental.pallas import tpu as pltpu


def _round_up(n, m):
    return ((n + m - 1) // m) * m


def _lane_pad(n):
    return _round_up(max(n, 1), 128)


def _vmem_budget_bytes():
    """Per-generation scoped-VMEM limit: capacity minus headroom."""
    cap = None
    try:
        cap = getattr(pltpu.get_tpu_info(), "vmem_capacity_bytes", None)
    except Exception:  # non-TPU backend / very old runtime
        cap = None
    if not cap:
        cap = 64 * 1024 * 1024  # conservative (v7x-sized) fallback
    headroom = min(16 * 1024 * 1024, cap // 4)
    return int(cap - headroom)


def _pack_gather_kernel(row_map_ref, x_ref, o_ref, *, tiles_per_block, g, unroll):
    """Gathers tiles_per_block * 8 lane-grouped output rows per grid step.

    row_map_ref (SMEM, scalar prefetch): packed slot k -> source row of x_ref;
        padding slots point at the trailing all-zero row.
    x_ref: (B*T + 1, D) flattened input plus zero row, whole-array VMEM
        resident (fetched once, single buffer).
    o_ref: (block_rows, g*D) output block. Rows are assembled 8 at a time and
        stored with one (8, g*D) store (a full unmasked (8,128) vst whenever
        D divides 128), removing the single-sublane vst as the binder.
    """
    base = pl.program_id(0) * (tiles_per_block * 8 * g)

    def tile_body(tile, carry):
        k0 = base + tile * (8 * g)
        rows = []
        for r in range(8):
            parts = [
                x_ref[pl.ds(row_map_ref[k0 + r * g + i], 1), :] for i in range(g)
            ]
            rows.append(parts[0] if g == 1 else jnp.concatenate(parts, axis=-1))
        o_ref[pl.ds(pl.multiple_of(tile * 8, 8), 8), :] = jnp.concatenate(rows, axis=0)
        return carry

    lax.fori_loop(0, tiles_per_block, tile_body, 0,
                  unroll=max(1, min(unroll, tiles_per_block)))


def pack_sequence(x, lengths, *, max_rows_per_block=2048, unroll=2):
    """Pallas equivalent of PackSequence.forward (batch_first=True).

    Returns:
      data            : (B*T, D) — first batch_sizes.sum() rows == PackedSequence.data
      batch_sizes     : (T,)     int32
      sorted_indices  : (B,)     int32
      unsorted_indices: (B,)     int32
      sorted_lengths  : (B,)     int32  (== lengths[sorted_indices], the 2nd
                                          return value of the PyTorch module)
    """
    B, T, D = x.shape
    lengths = lengths.astype(jnp.int32)
    itemsize = jnp.dtype(x.dtype).itemsize

    # ---- index bookkeeping (mirrors pack_padded_sequence(enforce_sorted=False)) ----
    # NOTE: stable argsort pins tie order among equal lengths; PyTorch's sort is
    # not guaranteed stable, so tied-length row order may differ (still a valid
    # packing). Assumes 0 < lengths[i] <= T (PyTorch raises; traced values can't).
    sorted_indices = jnp.argsort(-lengths, stable=True).astype(jnp.int32)
    sorted_lengths = lengths[sorted_indices]
    unsorted_indices = jnp.argsort(sorted_indices, stable=True).astype(jnp.int32)

    t_range = jnp.arange(T, dtype=jnp.int32)
    batch_sizes = jnp.sum(lengths[None, :] > t_range[:, None], axis=1).astype(jnp.int32)
    offsets = jnp.concatenate(
        [jnp.zeros((1,), jnp.int32), jnp.cumsum(batch_sizes)[:-1].astype(jnp.int32)]
    )

    # ---- static blocking / lane-density parameters ----
    if D < 128 and 128 % D == 0:
        g = 128 // D            # packed rows per 128-wide output row
    else:
        g = 1
    n_slots = B * T
    n_groups = pl.cdiv(n_slots, g)
    out_row_bytes = _lane_pad(g * D) * itemsize
    # ~max_rows_per_block packed rows per grid step (amortizes the ~0.35us/step
    # pipeline overhead), capped at ~2 MiB per output buffer, rounded up to a
    # multiple of 8 so the (8,128) second-to-last-dim constraint always holds.
    desired = max(8, min(max_rows_per_block // g, (2 * 1024 * 1024) // out_row_bytes))
    desired = _round_up(desired, 8)
    n_groups8 = _round_up(n_groups, 8)
    if n_groups8 <= desired:
        block_rows = n_groups8
        n_groups_pad = n_groups8
    else:
        block_rows = desired
        n_groups_pad = _round_up(n_groups8, block_rows)
    n_slots_pad = n_groups_pad * g
    tiles_per_block = block_rows // 8

    # ---- VMEM residency check with the lane-padded footprint ----
    vmem_limit = _vmem_budget_bytes()
    resident_bytes = _round_up(n_slots + 1, 8) * _lane_pad(D) * itemsize
    out_buf_bytes = 2 * block_rows * _lane_pad(g * D) * itemsize
    needed = resident_bytes + out_buf_bytes + (1 << 20)  # misc scratch margin
    if needed > vmem_limit:
        # TODO(synk): chunk x_src along rows (two-level gather over source
        # chunks) instead of keeping it fully VMEM-resident; note rows with
        # D<128 pad to full 128-lane slabs, so the wall is hit ~4x earlier
        # than raw bytes suggest.
        raise ValueError(
            f"pack_sequence: lane-padded resident source ({resident_bytes} B) "
            f"exceeds the VMEM budget ({vmem_limit} B); chunked gather not implemented.")

    # ---- packed-slot -> source-row map (invalid slots -> appended zero row) ----
    zero_row = jnp.int32(n_slots)
    tt, jj = jnp.meshgrid(jnp.arange(T, dtype=jnp.int32),
                          jnp.arange(B, dtype=jnp.int32), indexing="ij")   # (T, B)
    valid_tj = jj < batch_sizes[:, None]          # rank j active at time t?
    k_tj = offsets[:, None] + jj                  # packed slot index for (t, j)
    src_tj = sorted_indices[jj] * T + tt          # source row in flattened x
    scatter_idx = jnp.where(valid_tj, k_tj, n_slots_pad)   # OOB -> dropped
    row_map = jnp.full((n_slots_pad,), zero_row, jnp.int32).at[scatter_idx].set(
        src_tj.astype(jnp.int32), mode="drop")

    # Source buffer: flattened x plus one all-zero row (read by padding slots).
    # TODO(synk): for bf16/int8 inputs, pre-pack element pairs/quads into u32
    # with pltpu.bitcast so the gather stays 32-bit lane-dense.
    x_src = jnp.concatenate([x.reshape(n_slots, D), jnp.zeros((1, D), x.dtype)], axis=0)

    # TODO(synk): for large B, restructure as per-time-step contiguous copies
    # from a time-major sorted source (amortizes the per-row scalar addressing
    # that binds this gather) instead of the per-row SMEM-indexed gather.

    kernel = functools.partial(_pack_gather_kernel,
                               tiles_per_block=tiles_per_block, g=g, unroll=unroll)
    data_grouped = pl.pallas_call(
        kernel,
        out_shape=jax.ShapeDtypeStruct((n_groups_pad, g * D), x.dtype),
        grid_spec=pltpu.PrefetchScalarGridSpec(
            num_scalar_prefetch=1,
            grid=(n_groups_pad // block_rows,),
            in_specs=[
                # Whole-array VMEM residency: fetched once, single buffer
                # (the review's "don't double-buffer the constant-index
                # operand" / Buffered(1) request).
                pl.BlockSpec(memory_space=pltpu.MemorySpace.VMEM),
            ],
            out_specs=pl.BlockSpec((block_rows, g * D), lambda b, rm: (b, 0)),
        ),
        compiler_params=pltpu.CompilerParams(
            dimension_semantics=("parallel",),
            vmem_limit_bytes=vmem_limit,
        ),
        cost_estimate=pl.CostEstimate(
            flops=0,
            transcendentals=0,
            bytes_accessed=int(resident_bytes + n_groups_pad * out_row_bytes),
        ),
    )(row_map, x_src)

    # Undo the lane grouping (free: identical row-major layout), drop padding.
    data = data_grouped.reshape(n_slots_pad, D)
    if n_slots_pad > n_slots:
        data = data[:n_slots]

    return data, batch_sizes, sorted_indices, unsorted_indices, sorted_lengths


def _ref_pack(x_np, lens_np):
    """Pure-numpy reference of pack_padded_sequence(batch_first=True).data."""
    B, T, D = x_np.shape
    order = np.argsort(-lens_np, kind="stable")
    rows = []
    for t in range(T):
        for j in order:
            if lens_np[j] > t:
                rows.append(x_np[j, t])
    return np.stack(rows, axis=0)


if __name__ == "__main__":
    key = jax.random.PRNGKey(0)
    B, T, D = 4, 8, 32
    x = jax.random.normal(key, (B, T, D), dtype=jnp.float32)
    lengths = jnp.array([5, 8, 3, 6], dtype=jnp.int32)

    out = jax.block_until_ready(pack_sequence(x, lengths))
    data, batch_sizes, sorted_idx, unsorted_idx, sorted_lengths = out

    # --- correctness check against a pure-numpy reference ---
    x_np = np.asarray(x)
    lens_np = np.asarray(lengths)
    ref_data = _ref_pack(x_np, lens_np)
    total = int(lens_np.sum())

    np.testing.assert_allclose(np.asarray(data)[:total], ref_data, rtol=0, atol=0)
    np.testing.assert_array_equal(np.asarray(data)[total:], 0.0)

    ref_bs = np.array([(lens_np > t).sum() for t in range(T)], dtype=np.int32)
    np.testing.assert_array_equal(np.asarray(batch_sizes), ref_bs)

    ref_sorted = np.argsort(-lens_np, kind="stable")
    np.testing.assert_array_equal(np.asarray(sorted_idx), ref_sorted)
    np.testing.assert_array_equal(np.asarray(sorted_lengths), lens_np[ref_sorted])
    np.testing.assert_array_equal(np.asarray(unsorted_idx),
                                  np.argsort(ref_sorted, kind="stable"))

    print("KERNEL_OK")
</pallas_src>

<mosaic_0001>
module attributes {stable_mosaic.version = 11 : i64} {
  func.func @_pack_gather_kernel(%arg0: i32, %arg1: memref<32xi32, #tpu.memory_space<smem>>, %arg2: memref<33x32xf32, #tpu.memory_space<vmem>>, %arg3: memref<8x128xf32, #tpu.memory_space<vmem>>) attributes {dimension_semantics = [#tpu.dimension_semantics<parallel>], iteration_bounds = array<i64: 1>, scalar_prefetch = 1 : i64, scratch_operands = 0 : i64, tpu.core_type = #tpu.core_type<tc>, window_params = [{pipeline_mode = #tpu.pipeline_mode<synchronous>, transform_indices = @transform_0, window_bounds = array<i64: 33, 32>}, {transform_indices = @transform_1, window_bounds = array<i64: 8, 128>}]} {
    %c32_i32 = arith.constant 32 : i32
    %0 = arith.muli %arg0, %c32_i32 : i32
    %c0_i32 = arith.constant 0 : i32
    %c32_i32_0 = arith.constant 32 : i32
    %1 = arith.muli %c0_i32, %c32_i32_0 : i32
    %2 = arith.addi %0, %1 : i32
    %c0_i32_1 = arith.constant 0 : i32
    %3 = arith.addi %2, %c0_i32_1 : i32
    %c0_i32_2 = arith.constant 0 : i32
    %4 = arith.addi %3, %c0_i32_2 : i32
    %5 = arith.index_cast %4 : i32 to index
    %6 = memref.load %arg1[%5] : memref<32xi32, #tpu.memory_space<smem>>
    %7 = arith.index_cast %6 : i32 to index
    %c0 = arith.constant 0 : index
    %8 = vector.load %arg2[%7, %c0] : memref<33x32xf32, #tpu.memory_space<vmem>>, vector<1x32xf32>
    %c0_i32_3 = arith.constant 0 : i32
    %9 = arith.addi %2, %c0_i32_3 : i32
    %c1_i32 = arith.constant 1 : i32
    %10 = arith.addi %9, %c1_i32 : i32
    %11 = arith.index_cast %10 : i32 to index
    %12 = memref.load %arg1[%11] : memref<32xi32, #tpu.memory_space<smem>>
    %13 = arith.index_cast %12 : i32 to index
    %c0_4 = arith.constant 0 : index
    %14 = vector.load %arg2[%13, %c0_4] : memref<33x32xf32, #tpu.memory_space<vmem>>, vector<1x32xf32>
    %c0_i32_5 = arith.constant 0 : i32
    %15 = arith.addi %2, %c0_i32_5 : i32
    %c2_i32 = arith.constant 2 : i32
    %16 = arith.addi %15, %c2_i32 : i32
    %17 = arith.index_cast %16 : i32 to index
    %18 = memref.load %arg1[%17] : memref<32xi32, #tpu.memory_space<smem>>
    %19 = arith.index_cast %18 : i32 to index
    %c0_6 = arith.constant 0 : index
    %20 = vector.load %arg2[%19, %c0_6] : memref<33x32xf32, #tpu.memory_space<vmem>>, vector<1x32xf32>
    %c0_i32_7 = arith.constant 0 : i32
    %21 = arith.addi %2, %c0_i32_7 : i32
    %c3_i32 = arith.constant 3 : i32
    %22 = arith.addi %21, %c3_i32 : i32
    %23 = arith.index_cast %22 : i32 to index
    %24 = memref.load %arg1[%23] : memref<32xi32, #tpu.memory_space<smem>>
    %25 = arith.index_cast %24 : i32 to index
    %c0_8 = arith.constant 0 : index
    %26 = vector.load %arg2[%25, %c0_8] : memref<33x32xf32, #tpu.memory_space<vmem>>, vector<1x32xf32>
    %27 = tpu.concatenate %8, %14, %20, %26 in 1 : vector<1x32xf32>, vector<1x32xf32>, vector<1x32xf32>, vector<1x32xf32> -> vector<1x128xf32>
    %c4_i32 = arith.constant 4 : i32
    %28 = arith.addi %2, %c4_i32 : i32
    %c0_i32_9 = arith.constant 0 : i32
    %29 = arith.addi %28, %c0_i32_9 : i32
    %30 = arith.index_cast %29 : i32 to index
    %31 = memref.load %arg1[%30] : memref<32xi32, #tpu.memory_space<smem>>
    %32 = arith.index_cast %31 : i32 to index
    %c0_10 = arith.constant 0 : index
    %33 = vector.load %arg2[%32, %c0_10] : memref<33x32xf32, #tpu.memory_space<vmem>>, vector<1x32xf32>
    %c4_i32_11 = arith.constant 4 : i32
    %34 = arith.addi %2, %c4_i32_11 : i32
    %c1_i32_12 = arith.constant 1 : i32
    %35 = arith.addi %34, %c1_i32_12 : i32
    %36 = arith.index_cast %35 : i32 to index
    %37 = memref.load %arg1[%36] : memref<32xi32, #tpu.memory_space<smem>>
    %38 = arith.index_cast %37 : i32 to index
    %c0_13 = arith.constant 0 : index
    %39 = vector.load %arg2[%38, %c0_13] : memref<33x32xf32, #tpu.memory_space<vmem>>, vector<1x32xf32>
    %c4_i32_14 = arith.constant 4 : i32
    %40 = arith.addi %2, %c4_i32_14 : i32
    %c2_i32_15 = arith.constant 2 : i32
    %41 = arith.addi %40, %c2_i32_15 : i32
    %42 = arith.index_cast %41 : i32 to index
    %43 = memref.load %arg1[%42] : memref<32xi32, #tpu.memory_space<smem>>
    %44 = arith.index_cast %43 : i32 to index
    %c0_16 = arith.constant 0 : index
    %45 = vector.load %arg2[%44, %c0_16] : memref<33x32xf32, #tpu.memory_space<vmem>>, vector<1x32xf32>
    %c4_i32_17 = arith.constant 4 : i32
    %46 = arith.addi %2, %c4_i32_17 : i32
    %c3_i32_18 = arith.constant 3 : i32
    %47 = arith.addi %46, %c3_i32_18 : i32
    %48 = arith.index_cast %47 : i32 to index
    %49 = memref.load %arg1[%48] : memref<32xi32, #tpu.memory_space<smem>>
    %50 = arith.index_cast %49 : i32 to index
    %c0_19 = arith.constant 0 : index
    %51 = vector.load %arg2[%50, %c0_19] : memref<33x32xf32, #tpu.memory_space<vmem>>, vector<1x32xf32>
    %52 = tpu.concatenate %33, %39, %45, %51 in 1 : vector<1x32xf32>, vector<1x32xf32>, vector<1x32xf32>, vector<1x32xf32> -> vector<1x128xf32>
    %c8_i32 = arith.constant 8 : i32
    %53 = arith.addi %2, %c8_i32 : i32
    %c0_i32_20 = arith.constant 0 : i32
    %54 = arith.addi %53, %c0_i32_20 : i32
    %55 = arith.index_cast %54 : i32 to index
    %56 = memref.load %arg1[%55] : memref<32xi32, #tpu.memory_space<smem>>
    %57 = arith.index_cast %56 : i32 to index
    %c0_21 = arith.constant 0 : index
    %58 = vector.load %arg2[%57, %c0_21] : memref<33x32xf32, #tpu.memory_space<vmem>>, vector<1x32xf32>
    %c8_i32_22 = arith.constant 8 : i32
    %59 = arith.addi %2, %c8_i32_22 : i32
    %c1_i32_23 = arith.constant 1 : i32
    %60 = arith.addi %59, %c1_i32_23 : i32
    %61 = arith.index_cast %60 : i32 to index
    %62 = memref.load %arg1[%61] : memref<32xi32, #tpu.memory_space<smem>>
    %63 = arith.index_cast %62 : i32 to index
    %c0_24 = arith.constant 0 : index
    %64 = vector.load %arg2[%63, %c0_24] : memref<33x32xf32, #tpu.memory_space<vmem>>, vector<1x32xf32>
    %c8_i32_25 = arith.constant 8 : i32
    %65 = arith.addi %2, %c8_i32_25 : i32
    %c2_i32_26 = arith.constant 2 : i32
    %66 = arith.addi %65, %c2_i32_26 : i32
    %67 = arith.index_cast %66 : i32 to index
    %68 = memref.load %arg1[%67] : memref<32xi32, #tpu.memory_space<smem>>
    %69 = arith.index_cast %68 : i32 to index
    %c0_27 = arith.constant 0 : index
    %70 = vector.load %arg2[%69, %c0_27] : memref<33x32xf32, #tpu.memory_space<vmem>>, vector<1x32xf32>
    %c8_i32_28 = arith.constant 8 : i32
    %71 = arith.addi %2, %c8_i32_28 : i32
    %c3_i32_29 = arith.constant 3 : i32
    %72 = arith.addi %71, %c3_i32_29 : i32
    %73 = arith.index_cast %72 : i32 to index
    %74 = memref.load %arg1[%73] : memref<32xi32, #tpu.memory_space<smem>>
    %75 = arith.index_cast %74 : i32 to index
    %c0_30 = arith.constant 0 : index
    %76 = vector.load %arg2[%75, %c0_30] : memref<33x32xf32, #tpu.memory_space<vmem>>, vector<1x32xf32>
    %77 = tpu.concatenate %58, %64, %70, %76 in 1 : vector<1x32xf32>, vector<1x32xf32>, vector<1x32xf32>, vector<1x32xf32> -> vector<1x128xf32>
    %c12_i32 = arith.constant 12 : i32
    %78 = arith.addi %2, %c12_i32 : i32
    %c0_i32_31 = arith.constant 0 : i32
    %79 = arith.addi %78, %c0_i32_31 : i32
    %80 = arith.index_cast %79 : i32 to index
    %81 = memref.load %arg1[%80] : memref<32xi32, #tpu.memory_space<smem>>
    %82 = arith.index_cast %81 : i32 to index
    %c0_32 = arith.constant 0 : index
    %83 = vector.load %arg2[%82, %c0_32] : memref<33x32xf32, #tpu.memory_space<vmem>>, vector<1x32xf32>
    %c12_i32_33 = arith.constant 12 : i32
    %84 = arith.addi %2, %c12_i32_33 : i32
    %c1_i32_34 = arith.constant 1 : i32
    %85 = arith.addi %84, %c1_i32_34 : i32
    %86 = arith.index_cast %85 : i32 to index
    %87 = memref.load %arg1[%86] : memref<32xi32, #tpu.memory_space<smem>>
    %88 = arith.index_cast %87 : i32 to index
    %c0_35 = arith.constant 0 : index
    %89 = vector.load %arg2[%88, %c0_35] : memref<33x32xf32, #tpu.memory_space<vmem>>, vector<1x32xf32>
    %c12_i32_36 = arith.constant 12 : i32
    %90 = arith.addi %2, %c12_i32_36 : i32
    %c2_i32_37 = arith.constant 2 : i32
    %91 = arith.addi %90, %c2_i32_37 : i32
    %92 = arith.index_cast %91 : i32 to index
    %93 = memref.load %arg1[%92] : memref<32xi32, #tpu.memory_space<smem>>
    %94 = arith.index_cast %93 : i32 to index
    %c0_38 = arith.constant 0 : index
    %95 = vector.load %arg2[%94, %c0_38] : memref<33x32xf32, #tpu.memory_space<vmem>>, vector<1x32xf32>
    %c12_i32_39 = arith.constant 12 : i32
    %96 = arith.addi %2, %c12_i32_39 : i32
    %c3_i32_40 = arith.constant 3 : i32
    %97 = arith.addi %96, %c3_i32_40 : i32
    %98 = arith.index_cast %97 : i32 to index
    %99 = memref.load %arg1[%98] : memref<32xi32, #tpu.memory_space<smem>>
    %100 = arith.index_cast %99 : i32 to index
    %c0_41 = arith.constant 0 : index
    %101 = vector.load %arg2[%100, %c0_41] : memref<33x32xf32, #tpu.memory_space<vmem>>, vector<1x32xf32>
    %102 = tpu.concatenate %83, %89, %95, %101 in 1 : vector<1x32xf32>, vector<1x32xf32>, vector<1x32xf32>, vector<1x32xf32> -> vector<1x128xf32>
    %c16_i32 = arith.constant 16 : i32
    %103 = arith.addi %2, %c16_i32 : i32
    %c0_i32_42 = arith.constant 0 : i32
    %104 = arith.addi %103, %c0_i32_42 : i32
    %105 = arith.index_cast %104 : i32 to index
    %106 = memref.load %arg1[%105] : memref<32xi32, #tpu.memory_space<smem>>
    %107 = arith.index_cast %106 : i32 to index
    %c0_43 = arith.constant 0 : index
    %108 = vector.load %arg2[%107, %c0_43] : memref<33x32xf32, #tpu.memory_space<vmem>>, vector<1x32xf32>
    %c16_i32_44 = arith.constant 16 : i32
    %109 = arith.addi %2, %c16_i32_44 : i32
    %c1_i32_45 = arith.constant 1 : i32
    %110 = arith.addi %109, %c1_i32_45 : i32
    %111 = arith.index_cast %110 : i32 to index
    %112 = memref.load %arg1[%111] : memref<32xi32, #tpu.memory_space<smem>>
    %113 = arith.index_cast %112 : i32 to index
    %c0_46 = arith.constant 0 : index
    %114 = vector.load %arg2[%113, %c0_46] : memref<33x32xf32, #tpu.memory_space<vmem>>, vector<1x32xf32>
    %c16_i32_47 = arith.constant 16 : i32
    %115 = arith.addi %2, %c16_i32_47 : i32
    %c2_i32_48 = arith.constant 2 : i32
    %116 = arith.addi %115, %c2_i32_48 : i32
    %117 = arith.index_cast %116 : i32 to index
    %118 = memref.load %arg1[%117] : memref<32xi32, #tpu.memory_space<smem>>
    %119 = arith.index_cast %118 : i32 to index
    %c0_49 = arith.constant 0 : index
    %120 = vector.load %arg2[%119, %c0_49] : memref<33x32xf32, #tpu.memory_space<vmem>>, vector<1x32xf32>
    %c16_i32_50 = arith.constant 16 : i32
    %121 = arith.addi %2, %c16_i32_50 : i32
    %c3_i32_51 = arith.constant 3 : i32
    %122 = arith.addi %121, %c3_i32_51 : i32
    %123 = arith.index_cast %122 : i32 to index
    %124 = memref.load %arg1[%123] : memref<32xi32, #tpu.memory_space<smem>>
    %125 = arith.index_cast %124 : i32 to index
    %c0_52 = arith.constant 0 : index
    %126 = vector.load %arg2[%125, %c0_52] : memref<33x32xf32, #tpu.memory_space<vmem>>, vector<1x32xf32>
    %127 = tpu.concatenate %108, %114, %120, %126 in 1 : vector<1x32xf32>, vector<1x32xf32>, vector<1x32xf32>, vector<1x32xf32> -> vector<1x128xf32>
    %c20_i32 = arith.constant 20 : i32
    %128 = arith.addi %2, %c20_i32 : i32
    %c0_i32_53 = arith.constant 0 : i32
    %129 = arith.addi %128, %c0_i32_53 : i32
    %130 = arith.index_cast %129 : i32 to index
    %131 = memref.load %arg1[%130] : memref<32xi32, #tpu.memory_space<smem>>
    %132 = arith.index_cast %131 : i32 to index
    %c0_54 = arith.constant 0 : index
    %133 = vector.load %arg2[%132, %c0_54] : memref<33x32xf32, #tpu.memory_space<vmem>>, vector<1x32xf32>
    %c20_i32_55 = arith.constant 20 : i32
    %134 = arith.addi %2, %c20_i32_55 : i32
    %c1_i32_56 = arith.constant 1 : i32
    %135 = arith.addi %134, %c1_i32_56 : i32
    %136 = arith.index_cast %135 : i32 to index
    %137 = memref.load %arg1[%136] : memref<32xi32, #tpu.memory_space<smem>>
    %138 = arith.index_cast %137 : i32 to index
    %c0_57 = arith.constant 0 : index
    %139 = vector.load %arg2[%138, %c0_57] : memref<33x32xf32, #tpu.memory_space<vmem>>, vector<1x32xf32>
    %c20_i32_58 = arith.constant 20 : i32
    %140 = arith.addi %2, %c20_i32_58 : i32
    %c2_i32_59 = arith.constant 2 : i32
    %141 = arith.addi %140, %c2_i32_59 : i32
    %142 = arith.index_cast %141 : i32 to index
    %143 = memref.load %arg1[%142] : memref<32xi32, #tpu.memory_space<smem>>
    %144 = arith.index_cast %143 : i32 to index
    %c0_60 = arith.constant 0 : index
    %145 = vector.load %arg2[%144, %c0_60] : memref<33x32xf32, #tpu.memory_space<vmem>>, vector<1x32xf32>
    %c20_i32_61 = arith.constant 20 : i32
    %146 = arith.addi %2, %c20_i32_61 : i32
    %c3_i32_62 = arith.constant 3 : i32
    %147 = arith.addi %146, %c3_i32_62 : i32
    %148 = arith.index_cast %147 : i32 to index
    %149 = memref.load %arg1[%148] : memref<32xi32, #tpu.memory_space<smem>>
    %150 = arith.index_cast %149 : i32 to index
    %c0_63 = arith.constant 0 : index
    %151 = vector.load %arg2[%150, %c0_63] : memref<33x32xf32, #tpu.memory_space<vmem>>, vector<1x32xf32>
    %152 = tpu.concatenate %133, %139, %145, %151 in 1 : vector<1x32xf32>, vector<1x32xf32>, vector<1x32xf32>, vector<1x32xf32> -> vector<1x128xf32>
    %c24_i32 = arith.constant 24 : i32
    %153 = arith.addi %2, %c24_i32 : i32
    %c0_i32_64 = arith.constant 0 : i32
    %154 = arith.addi %153, %c0_i32_64 : i32
    %155 = arith.index_cast %154 : i32 to index
    %156 = memref.load %arg1[%155] : memref<32xi32, #tpu.memory_space<smem>>
    %157 = arith.index_cast %156 : i32 to index
    %c0_65 = arith.constant 0 : index
    %158 = vector.load %arg2[%157, %c0_65] : memref<33x32xf32, #tpu.memory_space<vmem>>, vector<1x32xf32>
    %c24_i32_66 = arith.constant 24 : i32
    %159 = arith.addi %2, %c24_i32_66 : i32
    %c1_i32_67 = arith.constant 1 : i32
    %160 = arith.addi %159, %c1_i32_67 : i32
    %161 = arith.index_cast %160 : i32 to index
    %162 = memref.load %arg1[%161] : memref<32xi32, #tpu.memory_space<smem>>
    %163 = arith.index_cast %162 : i32 to index
    %c0_68 = arith.constant 0 : index
    %164 = vector.load %arg2[%163, %c0_68] : memref<33x32xf32, #tpu.memory_space<vmem>>, vector<1x32xf32>
    %c24_i32_69 = arith.constant 24 : i32
    %165 = arith.addi %2, %c24_i32_69 : i32
    %c2_i32_70 = arith.constant 2 : i32
    %166 = arith.addi %165, %c2_i32_70 : i32
    %167 = arith.index_cast %166 : i32 to index
    %168 = memref.load %arg1[%167] : memref<32xi32, #tpu.memory_space<smem>>
    %169 = arith.index_cast %168 : i32 to index
    %c0_71 = arith.constant 0 : index
    %170 = vector.load %arg2[%169, %c0_71] : memref<33x32xf32, #tpu.memory_space<vmem>>, vector<1x32xf32>
    %c24_i32_72 = arith.constant 24 : i32
    %171 = arith.addi %2, %c24_i32_72 : i32
    %c3_i32_73 = arith.constant 3 : i32
    %172 = arith.addi %171, %c3_i32_73 : i32
    %173 = arith.index_cast %172 : i32 to index
    %174 = memref.load %arg1[%173] : memref<32xi32, #tpu.memory_space<smem>>
    %175 = arith.index_cast %174 : i32 to index
    %c0_74 = arith.constant 0 : index
    %176 = vector.load %arg2[%175, %c0_74] : memref<33x32xf32, #tpu.memory_space<vmem>>, vector<1x32xf32>
    %177 = tpu.concatenate %158, %164, %170, %176 in 1 : vector<1x32xf32>, vector<1x32xf32>, vector<1x32xf32>, vector<1x32xf32> -> vector<1x128xf32>
    %c28_i32 = arith.constant 28 : i32
    %178 = arith.addi %2, %c28_i32 : i32
    %c0_i32_75 = arith.constant 0 : i32
    %179 = arith.addi %178, %c0_i32_75 : i32
    %180 = arith.index_cast %179 : i32 to index
    %181 = memref.load %arg1[%180] : memref<32xi32, #tpu.memory_space<smem>>
    %182 = arith.index_cast %181 : i32 to index
    %c0_76 = arith.constant 0 : index
    %183 = vector.load %arg2[%182, %c0_76] : memref<33x32xf32, #tpu.memory_space<vmem>>, vector<1x32xf32>
    %c28_i32_77 = arith.constant 28 : i32
    %184 = arith.addi %2, %c28_i32_77 : i32
    %c1_i32_78 = arith.constant 1 : i32
    %185 = arith.addi %184, %c1_i32_78 : i32
    %186 = arith.index_cast %185 : i32 to index
    %187 = memref.load %arg1[%186] : memref<32xi32, #tpu.memory_space<smem>>
    %188 = arith.index_cast %187 : i32 to index
    %c0_79 = arith.constant 0 : index
    %189 = vector.load %arg2[%188, %c0_79] : memref<33x32xf32, #tpu.memory_space<vmem>>, vector<1x32xf32>
    %c28_i32_80 = arith.constant 28 : i32
    %190 = arith.addi %2, %c28_i32_80 : i32
    %c2_i32_81 = arith.constant 2 : i32
    %191 = arith.addi %190, %c2_i32_81 : i32
    %192 = arith.index_cast %191 : i32 to index
    %193 = memref.load %arg1[%192] : memref<32xi32, #tpu.memory_space<smem>>
    %194 = arith.index_cast %193 : i32 to index
    %c0_82 = arith.constant 0 : index
    %195 = vector.load %arg2[%194, %c0_82] : memref<33x32xf32, #tpu.memory_space<vmem>>, vector<1x32xf32>
    %c28_i32_83 = arith.constant 28 : i32
    %196 = arith.addi %2, %c28_i32_83 : i32
    %c3_i32_84 = arith.constant 3 : i32
    %197 = arith.addi %196, %c3_i32_84 : i32
    %198 = arith.index_cast %197 : i32 to index
    %199 = memref.load %arg1[%198] : memref<32xi32, #tpu.memory_space<smem>>
    %200 = arith.index_cast %199 : i32 to index
    %c0_85 = arith.constant 0 : index
    %201 = vector.load %arg2[%200, %c0_85] : memref<33x32xf32, #tpu.memory_space<vmem>>, vector<1x32xf32>
    %202 = tpu.concatenate %183, %189, %195, %201 in 1 : vector<1x32xf32>, vector<1x32xf32>, vector<1x32xf32>, vector<1x32xf32> -> vector<1x128xf32>
    %203 = tpu.concatenate %27, %52, %77, %102, %127, %152, %177, %202 in 0 : vector<1x128xf32>, vector<1x128xf32>, vector<1x128xf32>, vector<1x128xf32>, vector<1x128xf32>, vector<1x128xf32>, vector<1x128xf32>, vector<1x128xf32> -> vector<8x128xf32>
    %c8_i32_86 = arith.constant 8 : i32
    %204 = arith.muli %c0_i32, %c8_i32_86 : i32
    %205 = tpu.assume_multiple %204, 8 : i32
    %206 = arith.index_cast %205 : i32 to index
    %c0_87 = arith.constant 0 : index
    %207 = vector.load %arg3[%206, %c0_87] : memref<8x128xf32, #tpu.memory_space<vmem>>, vector<8x128xf32>
    tpu.vector_store %arg3[%206, %c0_87], %203 {strides = array<i32>} : memref<8x128xf32, #tpu.memory_space<vmem>>, vector<8x128xf32>,
    %c1_i32_88 = arith.constant 1 : i32
    return
  }
  func.func @transform_0(%arg0: i32, %arg1: memref<32xi32, #tpu.memory_space<smem>>) -> (i32, i32) {
    %c0_i32 = arith.constant 0 : i32
    %c0_i32_0 = arith.constant 0 : i32
    %c0_i32_1 = arith.constant 0 : i32
    return %c0_i32, %c0_i32_0 : i32, i32
  }
  func.func @transform_1(%arg0: i32, %arg1: memref<32xi32, #tpu.memory_space<smem>>) -> (i32, i32) {
    %c0_i32 = arith.constant 0 : i32
    %c0_i32_0 = arith.constant 0 : i32
    return %arg0, %c0_i32 : i32, i32
  }
}

</mosaic_0001>

<llo_original>
// kernel: tpu_custom_call.1
$region0: #{tpu_custom_call.1}
  #allocation0 [shape = 'u32[]', space=smem, size = 0x4, offset = 0x4, fixed_abs, tag = 'smem constant byte address 0x4 - core index']
  #allocation1 [shape = 'u32[144,128]{1,0:T(1,128)}', space=vmem, size = 0x12000, scoped, tag = 'internal scratch']
  #allocation2 [shape = 's32[1]{0}', space=sflag, size = 0x4, scoped, tag = 'scoped memory for tpu_custom_call.1']
  #allocation3 [shape = 'u8[512]{0}', space=smem, size = 0x200, scoped, tag = 'prefetched SMEM operand 0']
  %s0 = inlined_call_operand.vmem [shape: s32[32], index: 0, kind: input, shape index: {}]
  %s1 = inlined_call_operand.vmem [shape: f32[33,32], index: 1, kind: input, shape index: {}]
  %s2 = inlined_call_operand.hbm [shape: f32[8,128], index: 2, kind: output, shape index: {}]
  %s3 = sld [smem:[#allocation0]]
  $region14: #{tpu_custom_call.1} parent=0
    _
  %s5 = ssub.s32 1, %s3
  %s6 = scalar_select 0, %s5, %s3
  %s7 = sshll.u32 %s0, 4
  %s8 = int_to_ptr.vmem [resolvable:$true] %s7
  %10 = dma.vmem_to_smem %s8, 16, [#allocation3], [#allocation2]
  %11 = dma.done [#allocation2], 16
  %12 = sfence
  $region1: #{tpu_custom_call.1} parent=0
    #allocation4 [shape = 'u8[4096]{0}', space=vmem, size = 0x1000, scoped, tag = 'output window, operand 0, single buffered']
    #allocation5 [shape = 's32[1]{0}', space=sflag, size = 0x4, scoped, tag = 'scoped memory for tpu_custom_call.1']
    %13 = vsyncpa [#allocation5], 0
    // Predicated region
    $region2: #{tpu_custom_call.1} parent=1 // pred_check
      _
    $region3: #{tpu_custom_call.1} parent=1 // pred_check_branch
      %15 = sbr.rel (0) target = $region5
    $region4: #{tpu_custom_call.1} parent=1 // pred_region
      _
    $region5: #{tpu_custom_call.1} parent=1 // pred_fallthru
      _
    %s16 = smul.u32 0, 32
    %s17 = sld [smem:[#allocation3 + %s16]]
    %s18 = scalar_lea.vmem %s1, %s17
    %v19 = vld [vmem:[%s18] sm:$0x1]
    %s20 = sadd.s32 %s16, 1
    %s21 = sld [smem:[#allocation3 + %s20]]
    %s22 = scalar_lea.vmem %s1, %s21
    %v23 = vld [vmem:[%s22] sm:$0x1]
    %s24 = sadd.s32 %s16, 2
    %s25 = sld [smem:[#allocation3 + %s24]]
    %s26 = scalar_lea.vmem %s1, %s25
    %v27 = vld [vmem:[%s26] sm:$0x1]
    %s28 = sadd.s32 %s16, 3
    %s29 = sld [smem:[#allocation3 + %s28]]
    %s30 = scalar_lea.vmem %s1, %s29
    %v31 = vld [vmem:[%s30] sm:$0x1]
    %33 = vrot.lane.b32.xlu0 %v23, 32
    %v34 = vpop.permute.xlu0 %33
    %37 = vrot.lane.b32.xlu0 %v27, 64
    %v38 = vpop.permute.xlu0 %37
    %41 = vrot.lane.b32.xlu0 %v31, 96
    %v42 = vpop.permute.xlu0 %41
    %vm44 = vcmask 261120
    %v45 = vsel %vm44, %v19, %v34
    %vm46 = vcmask 523264
    %v47 = vsel %vm46, %v45, %v38
    %vm48 = vcmask 785408
    %v49 = vsel %vm48, %v47, %v42
    %s50 = sadd.s32 %s16, 4
    %s51 = sld [smem:[#allocation3 + %s50]]
    %s52 = scalar_lea.vmem %s1, %s51
    %v53 = vld [vmem:[%s52] sm:$0x1]
    %s54 = sadd.s32 %s16, 5
    %s55 = sld [smem:[#allocation3 + %s54]]
    %s56 = scalar_lea.vmem %s1, %s55
    %v57 = vld [vmem:[%s56] sm:$0x1]
    %s58 = sadd.s32 %s16, 6
    %s59 = sld [smem:[#allocation3 + %s58]]
    %s60 = scalar_lea.vmem %s1, %s59
    %v61 = vld [vmem:[%s60] sm:$0x1]
    %s62 = sadd.s32 %s16, 7
    %s63 = sld [smem:[#allocation3 + %s62]]
    %s64 = scalar_lea.vmem %s1, %s63
    %v65 = vld [vmem:[%s64] sm:$0x1]
    %67 = vrot.lane.b32.xlu0 %v57, 32
    %v68 = vpop.permute.xlu0 %67
    %71 = vrot.lane.b32.xlu0 %v61, 64
    %v72 = vpop.permute.xlu0 %71
    %75 = vrot.lane.b32.xlu0 %v65, 96
    %v76 = vpop.permute.xlu0 %75
    %v78 = vsel %vm44, %v53, %v68
    %v79 = vsel %vm46, %v78, %v72
    %v80 = vsel %vm48, %v79, %v76
    %s81 = sadd.s32 %s16, 8
    %s82 = sld [smem:[#allocation3 + %s81]]
    %s83 = scalar_lea.vmem %s1, %s82
    %v84 = vld [vmem:[%s83] sm:$0x1]
    %s85 = sadd.s32 %s16, 9
    %s86 = sld [smem:[#allocation3 + %s85]]
    %s87 = scalar_lea.vmem %s1, %s86
    %v88 = vld [vmem:[%s87] sm:$0x1]
    %s89 = sadd.s32 %s16, 10
    %s90 = sld [smem:[#allocation3 + %s89]]
    %s91 = scalar_lea.vmem %s1, %s90
    %v92 = vld [vmem:[%s91] sm:$0x1]
    %s93 = sadd.s32 %s16, 11
    %s94 = sld [smem:[#allocation3 + %s93]]
    %s95 = scalar_lea.vmem %s1, %s94
    %v96 = vld [vmem:[%s95] sm:$0x1]
    %98 = vrot.lane.b32.xlu0 %v88, 32
    %v99 = vpop.permute.xlu0 %98
    %102 = vrot.lane.b32.xlu0 %v92, 64
    %v103 = vpop.permute.xlu0 %102
    %106 = vrot.lane.b32.xlu0 %v96, 96
    %v107 = vpop.permute.xlu0 %106
    %v109 = vsel %vm44, %v84, %v99
    %v110 = vsel %vm46, %v109, %v103
    %v111 = vsel %vm48, %v110, %v107
    %s112 = sadd.s32 %s16, 12
    %s113 = sld [smem:[#allocation3 + %s112]]
    %s114 = scalar_lea.vmem %s1, %s113
    %v115 = vld [vmem:[%s114] sm:$0x1]
    %s116 = sadd.s32 %s16, 13
    %s117 = sld [smem:[#allocation3 + %s116]]
    %s118 = scalar_lea.vmem %s1, %s117
    %v119 = vld [vmem:[%s118] sm:$0x1]
    %s120 = sadd.s32 %s16, 14
    %s121 = sld [smem:[#allocation3 + %s120]]
    %s122 = scalar_lea.vmem %s1, %s121
    %v123 = vld [vmem:[%s122] sm:$0x1]
    %s124 = sadd.s32 %s16, 15
    %s125 = sld [smem:[#allocation3 + %s124]]
    %s126 = scalar_lea.vmem %s1, %s125
    %v127 = vld [vmem:[%s126] sm:$0x1]
    %129 = vrot.lane.b32.xlu0 %v119, 32
    %v130 = vpop.permute.xlu0 %129
    %133 = vrot.lane.b32.xlu0 %v123, 64
    %v134 = vpop.permute.xlu0 %133
    %137 = vrot.lane.b32.xlu0 %v127, 96
    %v138 = vpop.permute.xlu0 %137
    %v140 = vsel %vm44, %v115, %v130
    %v141 = vsel %vm46, %v140, %v134
    %v142 = vsel %vm48, %v141, %v138
    %s143 = sadd.s32 %s16, 16
    %s144 = sld [smem:[#allocation3 + %s143]]
    %s145 = scalar_lea.vmem %s1, %s144
    %v146 = vld [vmem:[%s145] sm:$0x1]
    %s147 = sadd.s32 %s16, 17
    %s148 = sld [smem:[#allocation3 + %s147]]
    %s149 = scalar_lea.vmem %s1, %s148
    %v150 = vld [vmem:[%s149] sm:$0x1]
    %s151 = sadd.s32 %s16, 18
    %s152 = sld [smem:[#allocation3 + %s151]]
    %s153 = scalar_lea.vmem %s1, %s152
    %v154 = vld [vmem:[%s153] sm:$0x1]
    %s155 = sadd.s32 %s16, 19
    %s156 = sld [smem:[#allocation3 + %s155]]
    %s157 = scalar_lea.vmem %s1, %s156
    %v158 = vld [vmem:[%s157] sm:$0x1]
    %160 = vrot.lane.b32.xlu0 %v150, 32
    %v161 = vpop.permute.xlu0 %160
    %164 = vrot.lane.b32.xlu0 %v154, 64
    %v165 = vpop.permute.xlu0 %164
    %168 = vrot.lane.b32.xlu0 %v158, 96
    %v169 = vpop.permute.xlu0 %168
    %v171 = vsel %vm44, %v146, %v161
    %v172 = vsel %vm46, %v171, %v165
    %v173 = vsel %vm48, %v172, %v169
    %s174 = sadd.s32 %s16, 20
    %s175 = sld [smem:[#allocation3 + %s174]]
    %s176 = scalar_lea.vmem %s1, %s175
    %v177 = vld [vmem:[%s176] sm:$0x1]
    %s178 = sadd.s32 %s16, 21
    %s179 = sld [smem:[#allocation3 + %s178]]
    %s180 = scalar_lea.vmem %s1, %s179
    %v181 = vld [vmem:[%s180] sm:$0x1]
    %s182 = sadd.s32 %s16, 22
    %s183 = sld [smem:[#allocation3 + %s182]]
    %s184 = scalar_lea.vmem %s1, %s183
    %v185 = vld [vmem:[%s184] sm:$0x1]
    %s186 = sadd.s32 %s16, 23
    %s187 = sld [smem:[#allocation3 + %s186]]
    %s188 = scalar_lea.vmem %s1, %s187
    %v189 = vld [vmem:[%s188] sm:$0x1]
    %191 = vrot.lane.b32.xlu0 %v181, 32
    %v192 = vpop.permute.xlu0 %191
    %195 = vrot.lane.b32.xlu0 %v185, 64
    %v196 = vpop.permute.xlu0 %195
    %199 = vrot.lane.b32.xlu0 %v189, 96
    %v200 = vpop.permute.xlu0 %199
    %v202 = vsel %vm44, %v177, %v192
    %v203 = vsel %vm46, %v202, %v196
    %v204 = vsel %vm48, %v203, %v200
    %s205 = sadd.s32 %s16, 24
    %s206 = sld [smem:[#allocation3 + %s205]]
    %s207 = scalar_lea.vmem %s1, %s206
    %v208 = vld [vmem:[%s207] sm:$0x1]
    %s209 = sadd.s32 %s16, 25
    %s210 = sld [smem:[#allocation3 + %s209]]
    %s211 = scalar_lea.vmem %s1, %s210
    %v212 = vld [vmem:[%s211] sm:$0x1]
    %s213 = sadd.s32 %s16, 26
    %s214 = sld [smem:[#allocation3 + %s213]]
    %s215 = scalar_lea.vmem %s1, %s214
    %v216 = vld [vmem:[%s215] sm:$0x1]
    %s217 = sadd.s32 %s16, 27
    %s218 = sld [smem:[#allocation3 + %s217]]
    %s219 = scalar_lea.vmem %s1, %s218
    %v220 = vld [vmem:[%s219] sm:$0x1]
    %222 = vrot.lane.b32.xlu0 %v212, 32
    %v223 = vpop.permute.xlu0 %222
    %226 = vrot.lane.b32.xlu0 %v216, 64
    %v227 = vpop.permute.xlu0 %226
    %230 = vrot.lane.b32.xlu0 %v220, 96
    %v231 = vpop.permute.xlu0 %230
    %v233 = vsel %vm44, %v208, %v223
    %v234 = vsel %vm46, %v233, %v227
    %v235 = vsel %vm48, %v234, %v231
    %s236 = sadd.s32 %s16, 28
    %s237 = sld [smem:[#allocation3 + %s236]]
    %s238 = scalar_lea.vmem %s1, %s237
    %v239 = vld [vmem:[%s238] sm:$0x1]
    %s240 = sadd.s32 %s16, 29
    %s241 = sld [smem:[#allocation3 + %s240]]
    %s242 = scalar_lea.vmem %s1, %s241
    %v243 = vld [vmem:[%s242] sm:$0x1]
    %s244 = sadd.s32 %s16, 30
    %s245 = sld [smem:[#allocation3 + %s244]]
    %s246 = scalar_lea.vmem %s1, %s245
    %v247 = vld [vmem:[%s246] sm:$0x1]
    %s248 = sadd.s32 %s16, 31
    %s249 = sld [smem:[#allocation3 + %s248]]
    %s250 = scalar_lea.vmem %s1, %s249
    %v251 = vld [vmem:[%s250] sm:$0x1]
    %253 = vrot.lane.b32.xlu0 %v243, 32
    %v254 = vpop.permute.xlu0 %253
    %257 = vrot.lane.b32.xlu0 %v247, 64
    %v258 = vpop.permute.xlu0 %257
    %261 = vrot.lane.b32.xlu0 %v251, 96
    %v262 = vpop.permute.xlu0 %261
    %v264 = vsel %vm44, %v239, %v254
    %v265 = vsel %vm46, %v264, %v258
    %v266 = vsel %vm48, %v265, %v262
    %v268 = vrot.slane %v80, 7
    %v271 = vrot.slane %v111, 6
    %v274 = vrot.slane %v142, 5
    %v277 = vrot.slane %v173, 4
    %v280 = vrot.slane %v204, 3
    %v283 = vrot.slane %v235, 2
    %v286 = vrot.slane %v266, 1
    %vm288 = vcmask 1040384
    %v289 = vsel %vm288, %v49, %v268
    %vm290 = vcmask 1041408
    %v291 = vsel %vm290, %v289, %v271
    %vm292 = vcmask 1042432
    %v293 = vsel %vm292, %v291, %v274
    %vm294 = vcmask 1043456
    %v295 = vsel %vm294, %v293, %v277
    %vm296 = vcmask 1044480
    %v297 = vsel %vm296, %v295, %v280
    %vm298 = vcmask 1045504
    %v299 = vsel %vm298, %v297, %v283
    %vm300 = vcmask 1046528
    %v301 = vsel %vm300, %v299, %v286
    %302 = vst [vmem:[#allocation4] sm:$0xff] %v301
    // Predicated region
    $region6: #{tpu_custom_call.1} parent=1 // pred_check
      _
    $region7: #{tpu_custom_call.1} parent=1 // pred_check_branch
      %304 = sbr.rel (0) target = $region9
    $region8: #{tpu_custom_call.1} parent=1 // pred_region
      %s306 = ssub.s32 128, 128
      %307 = vsyncadd [#allocation5], %s306
      %s309 = sshll.u32 [#allocation4], 4
      %s310 = int_to_ptr.vmem [resolvable:$true] %s309
      %312 = dma.vmem_to_hbm [thread:$0]  %s310, 128, %s2, [#allocation5]
    $region9: #{tpu_custom_call.1} parent=1 // pred_fallthru
      _
    // Predicated region
    $region10: #{tpu_custom_call.1} parent=1 // pred_check
      _
    $region11: #{tpu_custom_call.1} parent=1 // pred_check_branch
      %314 = sbr.rel (0) target = $region13
    $region12: #{tpu_custom_call.1} parent=1 // pred_region
      %315 = dma.done [#allocation5], 128
    $region13: #{tpu_custom_call.1} parent=1 // pred_fallthru
      _
    %316 = vsyncpa [#allocation5], 1

</llo_original>
